<compile_context>
chip_gen: v7x
topology: tpu7x:2x2x1
jax: 0.10.0
libtpu: 0.0.40
codegen_flags: <defaults>
</compile_context>

<pallas_src>
import jax
import jax.numpy as jnp
from jax.experimental import pallas as pl
from jax.experimental.pallas import tpu as pltpu


def _round_up(x, m):
    return ((x + m - 1) // m) * m


def residual_linear_kernel(x_ref, w_ref, b_ref, o_ref):
    # x_ref: (tm, D)  f32   (full contraction dim resident)
    # w_ref: (D, tn)  bf16  (column tile of the weight)
    # b_ref: (1, tn)  f32
    # o_ref: (tm, tn)
    tn = o_ref.shape[-1]
    j = pl.program_id(1)

    x = x_ref[...]
    # fn(x): bf16 MXU matmul with f32 accumulation.
    y = jnp.dot(x.astype(jnp.bfloat16), w_ref[...],
                preferred_element_type=jnp.float32)
    y = y + b_ref[...]                               # bias in f32 (broadcast over rows)
    # Residual add in f32 against the matching feature slice of the f32 x.
    col0 = pl.multiple_of(j * tn, 128)
    o_ref[...] = (y + x_ref[:, pl.ds(col0, tn)]).astype(o_ref.dtype)


def residual_apply(x, w, b, *, tm=None, tn=None):
    """Residual(Linear): returns x @ W + b + x for x of shape [B, N, D]."""
    B, N, D = x.shape
    M = B * N

    # ---- tile / padding selection (lane-dense, (8,128)-aligned) -------------
    D_pad = _round_up(max(D, 128), 128)
    if tn is None:
        tn = D_pad if D_pad <= 1024 else 512
    D_pad = _round_up(D_pad, tn)

    M_pad = _round_up(M, 8)
    if tm is None:
        tm = 512                       # fixed row tile so the pipeline actually runs
    tm = min(tm, M_pad)
    M_pad = _round_up(M_pad, tm)       # full grid coverage, no dropped remainder

    # ---- pad operands --------------------------------------------------------
    x2 = jnp.pad(x.reshape(M, D), ((0, M_pad - M), (0, D_pad - D)))
    w_p = jnp.pad(w, ((0, D_pad - D), (0, D_pad - D))).astype(jnp.bfloat16)
    b_p = jnp.pad(b, (0, D_pad - D)).reshape(1, D_pad).astype(jnp.float32)

    grid = (M_pad // tm, D_pad // tn)

    # Double-buffered VMEM footprint of the tiles (+ headroom).
    vmem_bytes = 2 * (tm * D_pad * 4 + D_pad * tn * 2 + tn * 4 + tm * tn * 4)
    vmem_limit = int(max(vmem_bytes + (2 << 20), 16 << 20))

    cost = pl.CostEstimate(
        flops=2 * M_pad * D_pad * D_pad,
        transcendentals=0,
        bytes_accessed=2 * M_pad * D_pad * 4 + D_pad * D_pad * 2 + D_pad * 4,
    )

    out = pl.pallas_call(
        residual_linear_kernel,
        out_shape=jax.ShapeDtypeStruct((M_pad, D_pad), x.dtype),
        grid_spec=pltpu.PrefetchScalarGridSpec(
            num_scalar_prefetch=0,
            grid=grid,
            in_specs=[
                pl.BlockSpec((tm, D_pad), lambda i, j: (i, 0)),   # x row tile (full K)
                pl.BlockSpec((D_pad, tn), lambda i, j: (0, j)),   # weight column tile
                pl.BlockSpec((1, tn), lambda i, j: (0, j)),       # bias tile
            ],
            out_specs=pl.BlockSpec((tm, tn), lambda i, j: (i, j)),
        ),
        compiler_params=pltpu.CompilerParams(
            dimension_semantics=("parallel", "parallel"),
            vmem_limit_bytes=vmem_limit,
        ),
        cost_estimate=cost,
    )(x2, w_p, b_p)

    return out[:M, :D].reshape(B, N, D)


if __name__ == "__main__":
    key = jax.random.PRNGKey(0)
    kx, kw, kb = jax.random.split(key, 3)

    B, N, D = 2, 8, 32                     # batch, tokens, hidden
    x = jax.random.normal(kx, (B, N, D), dtype=jnp.float32)
    # deterministic "Linear(D, D)" parameters for the wrapped fn
    w = jax.random.normal(kw, (D, D), dtype=jnp.float32) * 0.02
    b = jax.random.normal(kb, (D,), dtype=jnp.float32) * 0.02

    out = jax.block_until_ready(residual_apply(x, w, b))
    assert out.shape == (B, N, D)

    # Reference with the same compute contract (bf16 MXU inputs, f32 accumulate,
    # f32 bias + residual): tight tolerance.
    ref_bf16 = (jnp.einsum("bnd,de->bne",
                           x.astype(jnp.bfloat16), w.astype(jnp.bfloat16),
                           preferred_element_type=jnp.float32)
                + b + x)
    assert jnp.allclose(out, ref_bf16, atol=1e-3, rtol=1e-3), \
        "mismatch vs bf16-matmul reference"

    # Pure-f32 reference: looser tolerance reflects the bf16 MXU input contract.
    ref_f32 = jnp.einsum("bnd,de->bne", x, w) + b + x
    assert jnp.allclose(out, ref_f32, atol=2e-2, rtol=2e-2), \
        "mismatch vs f32 reference"

    print("KERNEL_OK")
</pallas_src>

<mosaic_0001>
module attributes {stable_mosaic.version = 11 : i64} {
  func.func @residual_linear_kernel(%arg0: i32, %arg1: i32, %arg2: memref<16x128xf32, #tpu.memory_space<vmem>>, %arg3: memref<128x128xbf16, #tpu.memory_space<vmem>>, %arg4: memref<1x128xf32, #tpu.memory_space<vmem>>, %arg5: memref<16x128xf32, #tpu.memory_space<vmem>>) attributes {dimension_semantics = [#tpu.dimension_semantics<parallel>, #tpu.dimension_semantics<parallel>], iteration_bounds = array<i64: 1, 1>, scalar_prefetch = 0 : i64, scratch_operands = 0 : i64, tpu.core_type = #tpu.core_type<tc>, window_params = [{transform_indices = @transform_0, window_bounds = array<i64: 16, 128>}, {transform_indices = @transform_1, window_bounds = array<i64: 128, 128>}, {transform_indices = @transform_2, window_bounds = array<i64: 1, 128>}, {transform_indices = @transform_3, window_bounds = array<i64: 16, 128>}]} {
    %c0 = arith.constant 0 : index
    %c0_0 = arith.constant 0 : index
    %0 = vector.load %arg2[%c0, %c0_0] : memref<16x128xf32, #tpu.memory_space<vmem>>, vector<16x128xf32>
    %1 = arith.truncf %0 : vector<16x128xf32> to vector<16x128xbf16>
    %c0_1 = arith.constant 0 : index
    %c0_2 = arith.constant 0 : index
    %2 = vector.load %arg3[%c0_1, %c0_2] : memref<128x128xbf16, #tpu.memory_space<vmem>>, vector<128x128xbf16>
    %cst = arith.constant dense<0.000000e+00> : vector<16x128xf32>
    %3 = tpu.matmul %1, %2, %cst {dimension_numbers = #tpu.dot_dimension_numbers<[1], [0], [0], [1], [0, 0, 1, 1], [], []>} : vector<16x128xbf16>, vector<128x128xbf16>, vector<16x128xf32> -> vector<16x128xf32>
    %c0_3 = arith.constant 0 : index
    %c0_4 = arith.constant 0 : index
    %4 = vector.load %arg4[%c0_3, %c0_4] : memref<1x128xf32, #tpu.memory_space<vmem>>, vector<1x128xf32>
    %5 = vector.broadcast %4 : vector<1x128xf32> to vector<16x128xf32>
    %6 = arith.addf %3, %5 : vector<16x128xf32>
    %c128_i32 = arith.constant 128 : i32
    %7 = arith.muli %arg1, %c128_i32 : i32
    %8 = tpu.assume_multiple %7, 128 : i32
    %c0_5 = arith.constant 0 : index
    %9 = arith.index_cast %8 : i32 to index
    %10 = vector.load %arg2[%c0_5, %9] : memref<16x128xf32, #tpu.memory_space<vmem>>, vector<16x128xf32>
    %11 = arith.addf %6, %10 : vector<16x128xf32>
    %c0_6 = arith.constant 0 : index
    %c0_7 = arith.constant 0 : index
    %12 = vector.load %arg5[%c0_6, %c0_7] : memref<16x128xf32, #tpu.memory_space<vmem>>, vector<16x128xf32>
    tpu.vector_store %arg5[%c0_6, %c0_7], %11 {strides = array<i32>} : memref<16x128xf32, #tpu.memory_space<vmem>>, vector<16x128xf32>,
    return
  }
  func.func @transform_0(%arg0: i32, %arg1: i32) -> (i32, i32) {
    %c0_i32 = arith.constant 0 : i32
    %c0_i32_0 = arith.constant 0 : i32
    return %arg0, %c0_i32 : i32, i32
  }
  func.func @transform_1(%arg0: i32, %arg1: i32) -> (i32, i32) {
    %c0_i32 = arith.constant 0 : i32
    %c0_i32_0 = arith.constant 0 : i32
    return %c0_i32, %arg1 : i32, i32
  }
  func.func @transform_2(%arg0: i32, %arg1: i32) -> (i32, i32) {
    %c0_i32 = arith.constant 0 : i32
    %c0_i32_0 = arith.constant 0 : i32
    return %c0_i32, %arg1 : i32, i32
  }
  func.func @transform_3(%arg0: i32, %arg1: i32) -> (i32, i32) {
    %c0_i32 = arith.constant 0 : i32
    return %arg0, %arg1 : i32, i32
  }
}

</mosaic_0001>

<llo_original>
// kernel: tpu_custom_call.1
$region0: #{tpu_custom_call.1}
  #allocation0 [shape = 'u32[]', space=smem, size = 0x4, offset = 0x4, fixed_abs, tag = 'smem constant byte address 0x4 - core index']
  #allocation1 [shape = 'u32[144,128]{1,0:T(1,128)}', space=vmem, size = 0x12000, scoped, tag = 'internal scratch']
  %s0 = inlined_call_operand.hbm [shape: f32[16,128], index: 0, kind: input, shape index: {}]
  %s1 = inlined_call_operand.hbm [shape: bf16[128,128], index: 1, kind: input, shape index: {}]
  %s2 = inlined_call_operand.vmem [shape: f32[1,128], index: 2, kind: input, shape index: {}]
  %s3 = inlined_call_operand.hbm [shape: f32[16,128], index: 3, kind: output, shape index: {}]
  %s4 = sld [smem:[#allocation0]]
  $region30: #{tpu_custom_call.1} parent=0
    _
  %s6 = ssub.s32 1, %s4
  %s7 = scalar_select 0, %s6, %s4
  $region1: #{tpu_custom_call.1} parent=0
    #allocation2 [shape = 'u8[8192]{0}', space=vmem, size = 0x2000, scoped, tag = 'input window, operand 0, single buffered']
    #allocation3 [shape = 's32[1]{0}', space=sflag, size = 0x4, scoped, tag = 'scoped memory for tpu_custom_call.1']
    #allocation4 [shape = 's32[1]{0}', space=sflag, size = 0x4, scoped, tag = 'scoped memory for tpu_custom_call.1']
    #allocation5 [shape = 'u8[32768]{0}', space=vmem, size = 0x8000, scoped, tag = 'input window, operand 1, single buffered']
    #allocation6 [shape = 's32[1]{0}', space=sflag, size = 0x4, scoped, tag = 'scoped memory for tpu_custom_call.1']
    #allocation7 [shape = 'u8[8192]{0}', space=vmem, size = 0x2000, scoped, tag = 'output window, operand 0, single buffered']
    %8 = vsyncpa [#allocation3], 0
    %9 = vsyncpa [#allocation6], 0
    %10 = vsyncpa [#allocation4], 0
    // Predicated region
    $region2: #{tpu_custom_call.1} parent=1 // pred_check
      _
    $region3: #{tpu_custom_call.1} parent=1 // pred_check_branch
      %12 = sbr.rel (0) target = $region5
    $region4: #{tpu_custom_call.1} parent=1 // pred_region
      %s14 = ssub.s32 256, 256
      %15 = vsyncadd [#allocation3], %s14
      %s16 = sshll.u32 [#allocation2], 4
      %s17 = int_to_ptr.vmem [resolvable:$true] %s16
      %22 = dma.hbm_to_vmem [thread:$0]  %s0, 256, %s17, [#allocation3], 128, 128, 8
    $region5: #{tpu_custom_call.1} parent=1 // pred_fallthru
      _
    // Predicated region
    $region6: #{tpu_custom_call.1} parent=1 // pred_check
      _
    $region7: #{tpu_custom_call.1} parent=1 // pred_check_branch
      %24 = sbr.rel (0) target = $region9
    $region8: #{tpu_custom_call.1} parent=1 // pred_region
      %s26 = ssub.s32 1024, 1024
      %27 = vsyncadd [#allocation6], %s26
      %s28 = sshll.u32 [#allocation5], 4
      %s29 = int_to_ptr.vmem [resolvable:$true] %s28
      %34 = dma.hbm_to_vmem [thread:$0]  %s1, 1024, %s29, [#allocation6], 64, 64, 4
    $region9: #{tpu_custom_call.1} parent=1 // pred_fallthru
      _
    // Predicated region
    $region10: #{tpu_custom_call.1} parent=1 // pred_check
      _
    $region11: #{tpu_custom_call.1} parent=1 // pred_check_branch
      %36 = sbr.rel (0) target = $region13
    $region12: #{tpu_custom_call.1} parent=1 // pred_region
      _
    $region13: #{tpu_custom_call.1} parent=1 // pred_fallthru
      _
    // Predicated region
    $region14: #{tpu_custom_call.1} parent=1 // pred_check
      _
    $region15: #{tpu_custom_call.1} parent=1 // pred_check_branch
      %38 = sbr.rel (0) target = $region17
    $region16: #{tpu_custom_call.1} parent=1 // pred_region
      %39 = dma.done [#allocation3], 256
    $region17: #{tpu_custom_call.1} parent=1 // pred_fallthru
      _
    // Predicated region
    $region18: #{tpu_custom_call.1} parent=1 // pred_check
      _
    $region19: #{tpu_custom_call.1} parent=1 // pred_check_branch
      %41 = sbr.rel (0) target = $region21
    $region20: #{tpu_custom_call.1} parent=1 // pred_region
      %42 = dma.done [#allocation6], 1024
    $region21: #{tpu_custom_call.1} parent=1 // pred_fallthru
      _
    %v44 = vld [vmem:[#allocation2] sm:$0xff]
    %v45 = vld [vmem:[#allocation2 + $0x8] sm:$0xff]
    %v46 = vpack.c.bf16 %v45, %v44
    %v47 = vld [vmem:[#allocation5] sm:$0xf]
    %v48 = vld [vmem:[#allocation5 + $0x4] sm:$0xf]
    %v49 = vld [vmem:[#allocation5 + $0x8] sm:$0xf]
    %v50 = vld [vmem:[#allocation5 + $0xc] sm:$0xf]
    %v51 = vld [vmem:[#allocation5 + $0x10] sm:$0xf]
    %v52 = vld [vmem:[#allocation5 + $0x14] sm:$0xf]
    %v53 = vld [vmem:[#allocation5 + $0x18] sm:$0xf]
    %v54 = vld [vmem:[#allocation5 + $0x1c] sm:$0xf]
    %v55 = vld [vmem:[#allocation5 + $0x20] sm:$0xf]
    %v56 = vld [vmem:[#allocation5 + $0x24] sm:$0xf]
    %v57 = vld [vmem:[#allocation5 + $0x28] sm:$0xf]
    %v58 = vld [vmem:[#allocation5 + $0x2c] sm:$0xf]
    %v59 = vld [vmem:[#allocation5 + $0x30] sm:$0xf]
    %v60 = vld [vmem:[#allocation5 + $0x34] sm:$0xf]
    %v61 = vld [vmem:[#allocation5 + $0x38] sm:$0xf]
    %v62 = vld [vmem:[#allocation5 + $0x3c] sm:$0xf]
    %v63 = vld [vmem:[%s2] sm:$0x1]
    %v65 = vlaneseq
    %v66 = vshrl.u32 %v65, 7
    %v67 = vsub.s32 0, %v66
    %v68 = vrot.slane %v63, %v67
    %v86 = vunpack.c.l.b16 %v47
    %v87 = vunpack.c.l.b16 %v48
    %v88 = vunpack.c.l.b16 %v49
    %v89 = vunpack.c.l.b16 %v50
    %v90 = vunpack.c.l.b16 %v51
    %v91 = vunpack.c.l.b16 %v52
    %v92 = vunpack.c.l.b16 %v53
    %v93 = vunpack.c.l.b16 %v54
    %v94 = vunpack.c.l.b16 %v55
    %v95 = vunpack.c.l.b16 %v56
    %v96 = vunpack.c.l.b16 %v57
    %v97 = vunpack.c.l.b16 %v58
    %v98 = vunpack.c.l.b16 %v59
    %v99 = vunpack.c.l.b16 %v60
    %v100 = vunpack.c.l.b16 %v61
    %v101 = vunpack.c.l.b16 %v62
    %v102 = vpack.c.b16 %v87, %v86
    %v103 = vpack.c.b16 %v89, %v88
    %v104 = vpack.c.b16 %v91, %v90
    %v105 = vpack.c.b16 %v93, %v92
    %v106 = vpack.c.b16 %v95, %v94
    %v107 = vpack.c.b16 %v97, %v96
    %v108 = vpack.c.b16 %v99, %v98
    %v109 = vpack.c.b16 %v101, %v100
    %118 = vmatprep.subr.bf16.mxu0 0
    %119 = vmatpush1.bf16.msra.mxu0 %v102
    %120 = vmatprep.subr.bf16.mxu0 0
    %121 = vmatpush1.bf16.msra.mxu0 %v103
    %122 = vmatprep.subr.bf16.mxu0 0
    %123 = vmatpush1.bf16.msra.mxu0 %v104
    %124 = vmatprep.subr.bf16.mxu0 0
    %125 = vmatpush1.bf16.msra.mxu0 %v105
    %126 = vmatprep.subr.bf16.mxu0 0
    %127 = vmatpush1.bf16.msra.mxu0 %v106
    %128 = vmatprep.subr.bf16.mxu0 0
    %129 = vmatpush1.bf16.msra.mxu0 %v107
    %130 = vmatprep.subr.bf16.mxu0 0
    %131 = vmatpush1.bf16.msra.mxu0 %v108
    %132 = vmatprep.subr.bf16.mxu0 0
    %133 = vmatpush1.bf16.msra.mxu0 %v109
    %134 = vmatprep.subr.bf16.mxu0 0
    %135 = vmatpush1.bf16.msra.mxu0 0
    %136 = vmatprep.subr.bf16.mxu0 0
    %137 = vmatpush1.bf16.msra.mxu0 0
    %138 = vmatprep.subr.bf16.mxu0 0
    %139 = vmatpush1.bf16.msra.mxu0 0
    %140 = vmatprep.subr.bf16.mxu0 0
    %141 = vmatpush1.bf16.msra.mxu0 0
    %142 = vmatprep.subr.bf16.mxu0 0
    %143 = vmatpush1.bf16.msra.mxu0 0
    %144 = vmatprep.subr.bf16.mxu0 0
    %145 = vmatpush1.bf16.msra.mxu0 0
    %146 = vmatprep.subr.bf16.mxu0 0
    %147 = vmatpush1.bf16.msra.mxu0 0
    %148 = vmatprep.subr.bf16.mxu0 0
    %149 = vmatpush1.bf16.msra.mxu0 0
    %150 = vmatprep.mubr.bf16.mxu0 0
    %151 = vmatmul.mubr.bf16.gmra.mrb[0].mxu0 %v46
    %v152 = vpop.f32.mrb[0].mxu0
    %v153 = vadd.f32 %v68, %v152
    %v154 = vpop.f32.mrb[0].mxu0
    %v155 = vpop.f32.mrb[0].mxu0
    %v156 = vadd.f32 %v68, %v155
    %v157 = vpop.f32.mrb[0].mxu0
    %158 = vdwg.mxu0
    %s159 = smul.u32 0, 128
    %s160 = sshra.s32 %s159, 7
    %s161 = sand.u32 %s159, 127
    %s162 = scalar_lea.vmem [#allocation2], %s160
    %v163 = vld [vmem:[%s162] sm:$0xff]
    %v164 = vld [vmem:[%s162 + $0x8] sm:$0xff]
    %v165 = vadd.f32 %v153, %v163
    %v166 = vadd.f32 %v156, %v164
    %167 = vst [vmem:[#allocation7] sm:$0xff] %v165
    %168 = vst [vmem:[#allocation7 + $0x8] sm:$0xff] %v166
    // Predicated region
    $region22: #{tpu_custom_call.1} parent=1 // pred_check
      _
    $region23: #{tpu_custom_call.1} parent=1 // pred_check_branch
      %170 = sbr.rel (0) target = $region25
    $region24: #{tpu_custom_call.1} parent=1 // pred_region
      %s172 = ssub.s32 256, 256
      %173 = vsyncadd [#allocation4], %s172
      %s174 = sshll.u32 [#allocation7], 4
      %s175 = int_to_ptr.vmem [resolvable:$true] %s174
      %180 = dma.vmem_to_hbm [thread:$0]  %s175, 256, %s3, [#allocation4], 128, 128, 8
    $region25: #{tpu_custom_call.1} parent=1 // pred_fallthru
      _
    // Predicated region
    $region26: #{tpu_custom_call.1} parent=1 // pred_check
      _
    $region27: #{tpu_custom_call.1} parent=1 // pred_check_branch
      %182 = sbr.rel (0) target = $region29
    $region28: #{tpu_custom_call.1} parent=1 // pred_region
      %183 = dma.done [#allocation4], 256
    $region29: #{tpu_custom_call.1} parent=1 // pred_fallthru
      _
    %184 = vsyncpa [#allocation3], 1
    %185 = vsyncpa [#allocation6], 1
    %186 = vsyncpa [#allocation4], 1

</llo_original>
